<compile_context>
chip_gen: v5e
topology: v5e:2x2
jax: 0.10.0
libtpu: 0.0.40
codegen_flags: <defaults>
</compile_context>

<pallas_src>
import numpy as np

import jax
import jax.numpy as jnp
from jax.experimental import pallas as pl
from jax.experimental.pallas import tpu as pltpu


# ----------------------------------------------------------------------------
# helpers
# ----------------------------------------------------------------------------
def _ru(v: int, k: int) -> int:
    return -(-int(v) // int(k)) * int(k)


def _vmem_budget_and_limit():
    """Generation-aware (tile budget, vmem_limit_bytes)."""
    cap = 64 * 1024 * 1024  # conservative fallback = v7x per-TensorCore VMEM
    try:
        cap = int(pltpu.get_tpu_info().vmem_capacity_bytes)
    except Exception:
        pass
    # ~40 MiB of 64 MiB on v7x, 64 MiB of 128 MiB on v5e/v6e for the tiles.
    tile_budget = min(int(cap * 0.6), 64 * 1024 * 1024)
    vmem_limit = int(min(int(cap * 0.8), tile_budget + 16 * 1024 * 1024))
    return tile_budget, vmem_limit


def _pick_block_batch(B, per_elem_bytes, resident_bytes, budget_bytes, *, lane_flat):
    """Largest per-step batch tile whose *padded*, double-buffered footprint fits,
    while keeping at least 2 grid steps (megacore sharding / DMA overlap)."""
    avail = max(budget_bytes - resident_bytes, per_elem_bytes)
    cap = max(1, int(avail // per_elem_bytes))
    want_steps = 8 if B >= 64 else 2
    target = max(1, B // want_steps)
    if lane_flat:
        # bt is the second-minor dim of the flattened (bt, n*n)/(bt, m*m) blocks:
        # keep it a multiple of 8 (sublane) or equal to the whole (small) batch
        # so the (8,128) layout rule holds.
        if B <= 8:
            return B
        return max(8, (min(cap, target) // 8) * 8)
    return max(1, min(cap, target))


def _pad_batch(arr, b_pad):
    b = arr.shape[0]
    if b_pad == b:
        return arr
    pad = [(0, b_pad - b)] + [(0, 0)] * (arr.ndim - 1)
    return jnp.pad(arr, pad)


def _check_canonical_eye(eye, m, n):
    """Blocked path precondition: eye == torch.eye(m, n). Checked eagerly when
    `eye` is concrete; under tracing it is a documented precondition."""
    try:
        e = np.asarray(eye)
    except Exception:
        return  # traced value: cannot check here
    if not np.array_equal(e, np.eye(m, n, dtype=e.dtype)):
        raise ValueError(
            "blocked path requires eye == eye(output_size, input_size); "
            "use mode='flat' for arbitrary eye/add buffers.")


# ----------------------------------------------------------------------------
# kernels
# ----------------------------------------------------------------------------
def _spd_flat_kernel(x_ref, s_ref, add_ref, o_ref):
    # x_ref:   (bt, n*n)   lane-dense batch tile of flattened inputs
    # s_ref:   (n*n, m*m)  resident scatter matrix kron(eye, eye).T
    # add_ref: (1, m*m)    resident flattened diagonal fill (x.dtype)
    # o_ref:   (bt, m*m)   lane-dense output tile -> single unmasked store
    acc = jnp.dot(x_ref[...], s_ref[...], preferred_element_type=jnp.float32)
    o_ref[...] = (acc + add_ref[...].astype(jnp.float32)).astype(o_ref.dtype)


def _spd_blocked_kernel(x_ref, add_ref, o_ref):
    # x_ref: (bt, n, n); add_ref: (m, m) resident, already in x.dtype;
    # o_ref: (bt, m, m).  out = blockpad(x) + add, written with ONE full-tile
    # store (no partial/masked stores, no double write of the top-left block).
    bt, n, _ = x_ref.shape
    m = o_ref.shape[-1]
    x = x_ref[...]
    if m > n:
        x = jnp.concatenate([x, jnp.zeros((bt, n, m - n), x.dtype)], axis=2)
        x = jnp.concatenate([x, jnp.zeros((bt, m - n, m), x.dtype)], axis=1)
    o_ref[...] = x + add_ref[...][None, :, :]


# ----------------------------------------------------------------------------
# wrappers
# ----------------------------------------------------------------------------
def _flat_forward(x, eye, add, block_batch):
    B, n, _ = x.shape
    m = eye.shape[0]
    n2, m2 = n * n, m * m
    isz = jnp.dtype(x.dtype).itemsize

    # Exact for arbitrary eye/add:  out_flat = x_flat @ kron(eye, eye).T + add_flat
    s = jnp.kron(eye.astype(jnp.float32), eye.astype(jnp.float32)).T.astype(x.dtype)
    add_flat = add.reshape(1, m2).astype(x.dtype)
    x_flat = x.reshape(B, n2)                     # contiguous reshape: free

    budget, vmem_limit = _vmem_budget_and_limit()
    # Physically padded footprints (lane dim rounded to 128, sublane to 8).
    per_elem = 2 * isz * (_ru(n2, 128) + _ru(m2, 128))                 # dbl-buffered rows
    resident = 2 * isz * (_ru(n2, 8) * _ru(m2, 128) + 8 * _ru(m2, 128))
    bt = block_batch or _pick_block_batch(B, per_elem, resident, budget, lane_flat=True)

    b_pad = _ru(B, bt)
    x_flat = _pad_batch(x_flat, b_pad)
    grid = (b_pad // bt,)

    cost = pl.CostEstimate(
        flops=2 * b_pad * n2 * m2 + b_pad * m2,
        transcendentals=0,
        bytes_accessed=(b_pad * n2 + b_pad * m2 + n2 * m2 + m2) * isz,
    )

    out = pl.pallas_call(
        _spd_flat_kernel,
        out_shape=jax.ShapeDtypeStruct((b_pad, m2), x.dtype),
        grid_spec=pltpu.PrefetchScalarGridSpec(
            num_scalar_prefetch=0,
            grid=grid,
            in_specs=[
                pl.BlockSpec((bt, n2), lambda b: (b, 0)),
                pl.BlockSpec((n2, m2), lambda b: (0, 0)),   # resident scatter matrix
                pl.BlockSpec((1, m2), lambda b: (0, 0)),    # resident diagonal fill
            ],
            out_specs=pl.BlockSpec((bt, m2), lambda b: (b, 0)),
        ),
        compiler_params=pltpu.CompilerParams(
            dimension_semantics=("parallel",),
            vmem_limit_bytes=vmem_limit,
        ),
        cost_estimate=cost,
    )(x_flat, s, add_flat)

    return out[:B].reshape(B, m, m)


def _blocked_forward(x, add, m, block_batch):
    B, n, _ = x.shape
    isz = jnp.dtype(x.dtype).itemsize
    add = add.astype(x.dtype)                      # no per-step cast in the kernel

    budget, vmem_limit = _vmem_budget_and_limit()
    per_elem = 2 * isz * (_ru(n, 8) * _ru(n, 128) + _ru(m, 8) * _ru(m, 128))
    resident = 2 * isz * _ru(m, 8) * _ru(m, 128)
    bt = block_batch or _pick_block_batch(B, per_elem, resident, budget, lane_flat=False)

    b_pad = _ru(B, bt)
    xp = _pad_batch(x, b_pad)
    grid = (b_pad // bt,)

    cost = pl.CostEstimate(
        flops=b_pad * m * m,
        transcendentals=0,
        bytes_accessed=(b_pad * n * n + b_pad * m * m + m * m) * isz,
    )

    out = pl.pallas_call(
        _spd_blocked_kernel,
        out_shape=jax.ShapeDtypeStruct((b_pad, m, m), x.dtype),
        grid_spec=pltpu.PrefetchScalarGridSpec(
            num_scalar_prefetch=0,
            grid=grid,
            in_specs=[
                pl.BlockSpec((bt, n, n), lambda b: (b, 0, 0)),
                pl.BlockSpec((m, m), lambda b: (0, 0)),      # resident diagonal fill
            ],
            out_specs=pl.BlockSpec((bt, m, m), lambda b: (b, 0, 0)),
        ),
        compiler_params=pltpu.CompilerParams(
            dimension_semantics=("parallel",),
            vmem_limit_bytes=vmem_limit,
        ),
        cost_estimate=cost,
    )(xp, add)

    return out[:B]


def spd_increase_dim(x: jax.Array, eye: jax.Array, add: jax.Array,
                     *, mode: str = "auto", block_batch: int | None = None) -> jax.Array:
    """SPDIncreaseDim forward:  x (B,n,n), eye (m,n), add (m,m) -> (B,m,m)."""
    B, n, n2 = x.shape
    assert n == n2, "input must be a batch of square matrices"
    m = eye.shape[0]
    assert eye.shape == (m, n) and add.shape == (m, m)
    assert m >= n, "output_size must be >= input_size"

    if mode == "auto":
        mode = "flat" if (n * m <= 1024 and m <= 256) else "blocked"

    if mode == "flat":
        return _flat_forward(x, eye, add, block_batch)

    # Blocked fallback relies on eye being the module's rectangular identity.
    _check_canonical_eye(eye, m, n)
    return _blocked_forward(x, add, m, block_batch)


def make_spd_increase_dim_params(input_size: int, output_size: int):
    """Deterministic buffers matching the PyTorch module __init__."""
    eye = jnp.eye(output_size, input_size, dtype=jnp.float32)          # (m, n)
    add_diag = jnp.concatenate(
        [jnp.zeros((input_size,), jnp.float32),
         jnp.ones((output_size - input_size,), jnp.float32)])
    add = jnp.diag(add_diag)                                           # (m, m)
    return eye, add


# ----------------------------------------------------------------------------
# demo / self-check
# ----------------------------------------------------------------------------
if __name__ == "__main__":
    key = jax.random.PRNGKey(0)
    k1, k2 = jax.random.split(key)

    def reference(x, eye, add):
        # original baddbmm semantics
        return add[None] + jnp.einsum("mi,bij,nj->bmn", eye, x, eye)

    # --- lane-dense "flat" path (typical SPDNet increase-dim sizes) ---------
    B, n, m = 16, 16, 32
    eye, add = make_spd_increase_dim_params(n, m)
    a = jax.random.normal(k1, (B, n, n), dtype=jnp.float32)
    x = jnp.einsum("bij,bkj->bik", a, a)                 # SPD-ish inputs
    out = jax.block_until_ready(spd_increase_dim(x, eye, add))
    assert out.shape == (B, m, m)
    assert jnp.allclose(out, reference(x, eye, add), atol=1e-4, rtol=1e-4)

    # --- general "blocked" path (also exercises batch-tail padding) ---------
    B2 = 5
    a2 = jax.random.normal(k2, (B2, n, n), dtype=jnp.float32)
    x2 = jnp.einsum("bij,bkj->bik", a2, a2)
    out2 = jax.block_until_ready(spd_increase_dim(x2, eye, add, mode="blocked"))
    assert out2.shape == (B2, m, m)
    assert jnp.allclose(out2, reference(x2, eye, add), atol=1e-4, rtol=1e-4)

    print("KERNEL_OK")
</pallas_src>

<mosaic_0001>
module attributes {stable_mosaic.version = 11 : i64} {
  func.func @_spd_flat_kernel(%arg0: i32, %arg1: memref<8x256xf32, #tpu.memory_space<vmem>>, %arg2: memref<256x1024xf32, #tpu.memory_space<vmem>>, %arg3: memref<1x1024xf32, #tpu.memory_space<vmem>>, %arg4: memref<8x1024xf32, #tpu.memory_space<vmem>>) attributes {dimension_semantics = [#tpu.dimension_semantics<parallel>], iteration_bounds = array<i64: 2>, scalar_prefetch = 0 : i64, scratch_operands = 0 : i64, tpu.core_type = #tpu.core_type<tc>, window_params = [{transform_indices = @transform_0, window_bounds = array<i64: 8, 256>}, {pipeline_mode = #tpu.pipeline_mode<synchronous>, transform_indices = @transform_1, window_bounds = array<i64: 256, 1024>}, {pipeline_mode = #tpu.pipeline_mode<synchronous>, transform_indices = @transform_2, window_bounds = array<i64: 1, 1024>}, {transform_indices = @transform_3, window_bounds = array<i64: 8, 1024>}]} {
    %c0 = arith.constant 0 : index
    %c0_0 = arith.constant 0 : index
    %0 = vector.load %arg1[%c0, %c0_0] : memref<8x256xf32, #tpu.memory_space<vmem>>, vector<8x256xf32>
    %c0_1 = arith.constant 0 : index
    %c0_2 = arith.constant 0 : index
    %1 = vector.load %arg2[%c0_1, %c0_2] : memref<256x1024xf32, #tpu.memory_space<vmem>>, vector<256x1024xf32>
    %cst = arith.constant dense<0.000000e+00> : vector<8x1024xf32>
    %2 = tpu.matmul %0, %1, %cst {dimension_numbers = #tpu.dot_dimension_numbers<[1], [0], [0], [1], [0, 0, 1, 1], [], []>} : vector<8x256xf32>, vector<256x1024xf32>, vector<8x1024xf32> -> vector<8x1024xf32>
    %c0_3 = arith.constant 0 : index
    %c0_4 = arith.constant 0 : index
    %3 = vector.load %arg3[%c0_3, %c0_4] : memref<1x1024xf32, #tpu.memory_space<vmem>>, vector<1x1024xf32>
    %4 = vector.broadcast %3 : vector<1x1024xf32> to vector<8x1024xf32>
    %5 = arith.addf %2, %4 : vector<8x1024xf32>
    %c0_5 = arith.constant 0 : index
    %c0_6 = arith.constant 0 : index
    %6 = vector.load %arg4[%c0_5, %c0_6] : memref<8x1024xf32, #tpu.memory_space<vmem>>, vector<8x1024xf32>
    tpu.vector_store %arg4[%c0_5, %c0_6], %5 {strides = array<i32>} : memref<8x1024xf32, #tpu.memory_space<vmem>>, vector<8x1024xf32>,
    return
  }
  func.func @transform_0(%arg0: i32) -> (i32, i32) {
    %c0_i32 = arith.constant 0 : i32
    %c0_i32_0 = arith.constant 0 : i32
    return %arg0, %c0_i32 : i32, i32
  }
  func.func @transform_1(%arg0: i32) -> (i32, i32) {
    %c0_i32 = arith.constant 0 : i32
    %c0_i32_0 = arith.constant 0 : i32
    %c0_i32_1 = arith.constant 0 : i32
    return %c0_i32, %c0_i32_0 : i32, i32
  }
  func.func @transform_2(%arg0: i32) -> (i32, i32) {
    %c0_i32 = arith.constant 0 : i32
    %c0_i32_0 = arith.constant 0 : i32
    %c0_i32_1 = arith.constant 0 : i32
    return %c0_i32, %c0_i32_0 : i32, i32
  }
  func.func @transform_3(%arg0: i32) -> (i32, i32) {
    %c0_i32 = arith.constant 0 : i32
    %c0_i32_0 = arith.constant 0 : i32
    return %arg0, %c0_i32 : i32, i32
  }
}

</mosaic_0001>

<llo_original>
// kernel: tpu_custom_call.1
$region0: #{tpu_custom_call.1}
  #allocation0 [shape = 'u32[]', space=smem, size = 0x4, offset = 0x4, fixed_abs, tag = 'smem constant byte address 0x4 - core index']
  #allocation1 [shape = 'u32[72,128]{1,0:T(1,128)}', space=vmem, size = 0x9000, scoped, tag = 'internal scratch']
  %s0 = inlined_call_operand.hbm [shape: f32[16,256], index: 0, kind: input, shape index: {}]
  %s1 = inlined_call_operand.hbm [shape: f32[256,1024], index: 1, kind: input, shape index: {}]
  %s2 = inlined_call_operand.hbm [shape: f32[1,1024], index: 2, kind: input, shape index: {}]
  %s3 = inlined_call_operand.hbm [shape: f32[16,1024], index: 3, kind: output, shape index: {}]
  %s4 = sld [smem:[#allocation0]]
  $region57: #{tpu_custom_call.1} parent=0
    _
  %s6 = ssub.s32 1, %s4
  %s7 = scalar_select 0, %s6, %s4
  $region1: #{tpu_custom_call.1} parent=0
    #allocation2 [shape = 'u8[16384]{0}', space=vmem, size = 0x4000, scoped, tag = 'input window, operand 0']
    #allocation3 [shape = 's32[2]{0}', space=sflag, size = 0x8, scoped, tag = 'scoped memory for tpu_custom_call.1']
    #allocation4 [shape = 's32[2]{0}', space=sflag, size = 0x8, scoped, tag = 'scoped memory for tpu_custom_call.1']
    #allocation5 [shape = 'u8[1048576]{0}', space=vmem, size = 0x100000, scoped, tag = 'input window, operand 1, single buffered']
    #allocation6 [shape = 's32[1]{0}', space=sflag, size = 0x4, scoped, tag = 'scoped memory for tpu_custom_call.1']
    #allocation7 [shape = 'u8[4096]{0}', space=vmem, size = 0x1000, scoped, tag = 'input window, operand 2, single buffered']
    #allocation8 [shape = 'u8[65536]{0}', space=vmem, size = 0x10000, scoped, tag = 'output window, operand 0']
    %8 = vsyncpa [#allocation3], 0
    %s9 = scalar_lea.sflag [#allocation3], 1
    %10 = vsyncpa %s9, 0
    %11 = vsyncpa [#allocation6], 0
    %12 = vsyncpa [#allocation4], 0
    %s13 = scalar_lea.sflag [#allocation4], 1
    %14 = vsyncpa %s13, 0
    loop: start=0, step=1, limit=4
    $region2: #{tpu_custom_call.1} parent=1 // loop_pre_header
      _
    $region3: #{tpu_custom_call.1} parent=1 // loop_header
      %s16 = sphi 0, %s20
      %p17 = scmp.ge.s32.totalorder %s16, 4
      %s26 = sphi 0, %s28
      %s29 = sphi 0, %s26
      %s30 = sphi 0, %s29
      %s46 = sphi 0, %s30
      %s50 = sphi 0, %s50
      %s52 = sphi 0, %s50
      %s53 = sphi 0, %s52
      %s67 = sphi 0, %s53
      %s71 = sphi 0, %s71
      %s73 = sphi 0, %s71
      %s74 = sphi 0, %s73
      %s88 = sphi 0, %s74
      %s94 = sphi 0, %s96
      %s97 = sphi 0, %s94
      %s98 = sphi 0, %s97
      %s114 = sphi 0, %s98
    $region4: #{tpu_custom_call.1} parent=1 // loop_header_branch
      %19 = sbr.rel (%p17) target = $region8
    $region5: #{tpu_custom_call.1} parent=1 // loop_body
      %s21 = ssub.s32 %s16, 1
      %s22 = ssub.s32 %s16, 2
      %s23 = sadd.s32 %s16, 1
      %s24 = ssub.s32 %s16, %s23
      %p25 = scmp.eq.s32.totalorder %s24, 0
      %s27 = sadd.s32 %s26, 1
      %s28 = scalar_select %p25, %s26, %s27
      %p31 = pneg %p25
      %p32 = scmp.eq.s32.totalorder %s16, 1
      %p33 = por %p31, %p32
      %p34 = scmp.ne.s32.totalorder %s26, %s29
      %p35 = scmp.eq.s32.totalorder %s16, 0
      %p36 = por %p34, %p35
      %p37 = scmp.ne.s32.totalorder %s26, %s29
      %p38 = scmp.eq.s32.totalorder %s21, 1
      %p39 = por %p37, %p38
      %p40 = scmp.ne.s32.totalorder %s29, %s30
      %p41 = scmp.eq.s32.totalorder %s21, 0
      %p42 = por %p40, %p41
      %p43 = scmp.ne.s32.totalorder %s29, %s30
      %p44 = scmp.eq.s32.totalorder %s22, 1
      %p45 = por %p43, %p44
      %p47 = scmp.ne.s32.totalorder %s30, %s46
      %p48 = scmp.eq.s32.totalorder %s22, 0
      %p49 = por %p47, %p48
      %s51 = sadd.s32 %s50, 1
      %p54 = scmp.eq.s32.totalorder %s16, 1
      %p55 = scmp.ne.s32.totalorder %s50, %s52
      %p56 = scmp.eq.s32.totalorder %s16, 0
      %p57 = por %p55, %p56
      %p58 = scmp.ne.s32.totalorder %s50, %s52
      %p59 = scmp.eq.s32.totalorder %s21, 1
      %p60 = por %p58, %p59
      %p61 = scmp.ne.s32.totalorder %s52, %s53
      %p62 = scmp.eq.s32.totalorder %s21, 0
      %p63 = por %p61, %p62
      %p64 = scmp.ne.s32.totalorder %s52, %s53
      %p65 = scmp.eq.s32.totalorder %s22, 1
      %p66 = por %p64, %p65
      %p68 = scmp.ne.s32.totalorder %s53, %s67
      %p69 = scmp.eq.s32.totalorder %s22, 0
      %p70 = por %p68, %p69
      %s72 = sadd.s32 %s71, 1
      %p75 = scmp.eq.s32.totalorder %s16, 1
      %p76 = scmp.ne.s32.totalorder %s71, %s73
      %p77 = scmp.eq.s32.totalorder %s16, 0
      %p78 = por %p76, %p77
      %p79 = scmp.ne.s32.totalorder %s71, %s73
      %p80 = scmp.eq.s32.totalorder %s21, 1
      %p81 = por %p79, %p80
      %p82 = scmp.ne.s32.totalorder %s73, %s74
      %p83 = scmp.eq.s32.totalorder %s21, 0
      %p84 = por %p82, %p83
      %p85 = scmp.ne.s32.totalorder %s73, %s74
      %p86 = scmp.eq.s32.totalorder %s22, 1
      %p87 = por %p85, %p86
      %p89 = scmp.ne.s32.totalorder %s74, %s88
      %p90 = scmp.eq.s32.totalorder %s22, 0
      %p91 = por %p89, %p90
      %s92 = ssub.s32 %s16, %s23
      %p93 = scmp.eq.s32.totalorder %s92, 0
      %s95 = sadd.s32 %s94, 1
      %s96 = scalar_select %p93, %s94, %s95
      %p99 = pneg %p93
      %p100 = scmp.eq.s32.totalorder %s16, 1
      %p101 = por %p99, %p100
      %p102 = scmp.ne.s32.totalorder %s94, %s97
      %p103 = scmp.eq.s32.totalorder %s16, 0
      %p104 = por %p102, %p103
      %p105 = scmp.ne.s32.totalorder %s94, %s97
      %p106 = scmp.eq.s32.totalorder %s21, 1
      %p107 = por %p105, %p106
      %p108 = scmp.ne.s32.totalorder %s97, %s98
      %p109 = scmp.eq.s32.totalorder %s21, 0
      %p110 = por %p108, %p109
      %p111 = scmp.ne.s32.totalorder %s97, %s98
      %p112 = scmp.eq.s32.totalorder %s22, 1
      %p113 = por %p111, %p112
      %p115 = scmp.ne.s32.totalorder %s98, %s114
      %p116 = scmp.eq.s32.totalorder %s22, 0
      %p117 = por %p115, %p116
      %p118 = scmp.le.s32.totalorder 1, %s16
      %p119 = scmp.lt.s32.totalorder %s16, 3
      %p120 = pnand %p118, %p119
      %p121 = pneg %p120
      // Predicated region
      $region9: #{tpu_custom_call.1} parent=5 // pred_check
        _
      $region10: #{tpu_custom_call.1} parent=5 // pred_check_branch
        %123 = sbr.rel (%p120) target = $region12
      $region11: #{tpu_custom_call.1} parent=5 // pred_region
        %s124 = ssub.s32 %s16, 1
        // Predicated region
        $region13: #{tpu_custom_call.1} parent=11 // pred_check
          %p125 = pneg %p63
        $region14: #{tpu_custom_call.1} parent=11 // pred_check_branch
          %127 = sbr.rel (%p125) target = $region16
        $region15: #{tpu_custom_call.1} parent=11 // pred_region
          %129 = vsyncadd [#allocation6], 0
          %s130 = sshll.u32 %s1, 4
          %s131 = int_to_ptr.hbm [resolvable:$true] %s130
          %s132 = sshll.u32 [#allocation5], 4
          %s133 = int_to_ptr.vmem [resolvable:$true] %s132
          %138 = dma.hbm_to_vmem [thread:$0]  %s131, 32768, %s133, [#allocation6], 1024, 1024, 64
        $region16: #{tpu_custom_call.1} parent=11 // pred_fallthru
          _
        // Predicated region
        $region17: #{tpu_custom_call.1} parent=11 // pred_check
          %p139 = pneg %p84
        $region18: #{tpu_custom_call.1} parent=11 // pred_check_branch
          %141 = sbr.rel (%p139) target = $region20
        $region19: #{tpu_custom_call.1} parent=11 // pred_region
          %143 = vsyncadd [#allocation6], 0
          %s145 = sshll.u32 %s2, 4
          %s146 = int_to_ptr.hbm [resolvable:$true] %s145
          %s147 = sshll.u32 [#allocation7], 4
          %s148 = int_to_ptr.vmem [resolvable:$true] %s147
          %150 = dma.hbm_to_vmem [thread:$0]  %s146, 128, %s148, [#allocation6]
        $region20: #{tpu_custom_call.1} parent=11 // pred_fallthru
          _
      $region12: #{tpu_custom_call.1} parent=5 // pred_fallthru
        _
      %p151 = scmp.lt.s32.totalorder %s16, 2
      // Predicated region
      $region21: #{tpu_custom_call.1} parent=5 // pred_check
        %p152 = pneg %p151
      $region22: #{tpu_custom_call.1} parent=5 // pred_check_branch
        %154 = sbr.rel (%p152) target = $region24
      $region23: #{tpu_custom_call.1} parent=5 // pred_region
        // Predicated region
        $region25: #{tpu_custom_call.1} parent=23 // pred_check
          %p155 = pneg %p36
        $region26: #{tpu_custom_call.1} parent=23 // pred_check_branch
          %157 = sbr.rel (%p155) target = $region28
        $region27: #{tpu_custom_call.1} parent=23 // pred_region
          %s158 = sand.u32 %s26, 1
          %s159 = scalar_lea.sflag [#allocation3], %s158
          %s160 = sand.u32 %s26, 1
          %s161 = smul.addr %s160, 16
          %s162 = scalar_lea.vmem [#allocation2], %s161
          %164 = vsyncadd %s159, 0
          %s165 = smul.addr %s16, 2
          %s166 = smul.addr %s165, 8
          %s167 = scalar_lea.hbm %s0, %s166
          %s169 = sshll.u32 %s167, 4
          %s170 = int_to_ptr.hbm [resolvable:$true] %s169
          %s171 = sshll.u32 %s162, 4
          %s172 = int_to_ptr.vmem [resolvable:$true] %s171
          %174 = dma.hbm_to_vmem [thread:$0]  %s170, 256, %s172, %s159
        $region28: #{tpu_custom_call.1} parent=23 // pred_fallthru
          _
      $region24: #{tpu_custom_call.1} parent=5 // pred_fallthru
        _
      %p175 = scmp.le.s32.totalorder 1, %s16
      %p176 = scmp.lt.s32.totalorder %s16, 3
      %p177 = pnand %p175, %p176
      %p178 = pneg %p177
      // Predicated region
      $region29: #{tpu_custom_call.1} parent=5 // pred_check
        _
      $region30: #{tpu_custom_call.1} parent=5 // pred_check_branch
        %180 = sbr.rel (%p177) target = $region32
      $region31: #{tpu_custom_call.1} parent=5 // pred_region
        %s181 = ssub.s32 %s16, 1
        %s182 = sand.u32 %s29, 1
        %s183 = scalar_lea.sflag [#allocation3], %s182
        %s184 = sand.u32 %s29, 1
        %s185 = smul.addr %s184, 16
        %s186 = scalar_lea.vmem [#allocation2], %s185
        // Predicated region
        $region33: #{tpu_custom_call.1} parent=31 // pred_check
          %p187 = pneg %p42
        $region34: #{tpu_custom_call.1} parent=31 // pred_check_branch
          %189 = sbr.rel (%p187) target = $region36
        $region35: #{tpu_custom_call.1} parent=31 // pred_region
          %191 = dma.done %s183, 256
        $region36: #{tpu_custom_call.1} parent=31 // pred_fallthru
          _
        // Predicated region
        $region37: #{tpu_custom_call.1} parent=31 // pred_check
          %p192 = pneg %p63
        $region38: #{tpu_custom_call.1} parent=31 // pred_check_branch
          %194 = sbr.rel (%p192) target = $region40
        $region39: #{tpu_custom_call.1} parent=31 // pred_region
          %196 = dma.done [#allocation6], 32768
        $region40: #{tpu_custom_call.1} parent=31 // pred_fallthru
          _
        // Predicated region
        $region41: #{tpu_custom_call.1} parent=31 // pred_check
          %p197 = pneg %p84
        $region42: #{tpu_custom_call.1} parent=31 // pred_check_branch
          %199 = sbr.rel (%p197) target = $region44
        $region43: #{tpu_custom_call.1} parent=31 // pred_region
          %201 = dma.done [#allocation6], 128
        $region44: #{tpu_custom_call.1} parent=31 // pred_fallthru
          _
        %s202 = sand.u32 %s29, 1
        %s203 = scalar_lea.sflag [#allocation3], %s202
        %s204 = sand.u32 %s29, 1
        %s205 = smul.addr %s204, 16
        %s206 = scalar_lea.vmem [#allocation2], %s205
        %p207 = pneg %p42
        %p208 = pneg %p39
        %p209 = pneg %p63
        %p210 = pneg %p60
        %p211 = pneg %p84
        %p212 = pneg %p81
        %p213 = pneg %p110
        %p214 = pneg %p107
        %s215 = sand.u32 %s97, 1
        %s216 = scalar_lea.sflag [#allocation4], %s215
        %s217 = sand.u32 %s97, 1
        %s218 = smul.addr %s217, 64
        %s219 = scalar_lea.vmem [#allocation8], %s218
        %v220 = vld [vmem:[%s186] sm:$0xff]
        %v221 = vld [vmem:[%s186 + $0x8] sm:$0xff]
        %v222 = vld [vmem:[#allocation5] sm:$0xff]
        %v223 = vld [vmem:[#allocation5 + $0x8] sm:$0xff]
        %v224 = vld [vmem:[#allocation5 + $0x10] sm:$0xff]
        %v225 = vld [vmem:[#allocation5 + $0x18] sm:$0xff]
        %v226 = vld [vmem:[#allocation5 + $0x20] sm:$0xff]
        %v227 = vld [vmem:[#allocation5 + $0x28] sm:$0xff]
        %v228 = vld [vmem:[#allocation5 + $0x30] sm:$0xff]
        %v229 = vld [vmem:[#allocation5 + $0x38] sm:$0xff]
        %v230 = vld [vmem:[#allocation5 + $0x40] sm:$0xff]
        %v231 = vld [vmem:[#allocation5 + $0x48] sm:$0xff]
        %v232 = vld [vmem:[#allocation5 + $0x50] sm:$0xff]
        %v233 = vld [vmem:[#allocation5 + $0x58] sm:$0xff]
        %v234 = vld [vmem:[#allocation5 + $0x60] sm:$0xff]
        %v235 = vld [vmem:[#allocation5 + $0x68] sm:$0xff]
        %v236 = vld [vmem:[#allocation5 + $0x70] sm:$0xff]
        %v237 = vld [vmem:[#allocation5 + $0x78] sm:$0xff]
        %v238 = vld [vmem:[#allocation5 + $0x80] sm:$0xff]
        %v239 = vld [vmem:[#allocation5 + $0x88] sm:$0xff]
        %v240 = vld [vmem:[#allocation5 + $0x90] sm:$0xff]
        %v241 = vld [vmem:[#allocation5 + $0x98] sm:$0xff]
        %v242 = vld [vmem:[#allocation5 + $0xa0] sm:$0xff]
        %v243 = vld [vmem:[#allocation5 + $0xa8] sm:$0xff]
        %v244 = vld [vmem:[#allocation5 + $0xb0] sm:$0xff]
        %v245 = vld [vmem:[#allocation5 + $0xb8] sm:$0xff]
        %v246 = vld [vmem:[#allocation5 + $0xc0] sm:$0xff]
        %v247 = vld [vmem:[#allocation5 + $0xc8] sm:$0xff]
        %v248 = vld [vmem:[#allocation5 + $0xd0] sm:$0xff]
        %v249 = vld [vmem:[#allocation5 + $0xd8] sm:$0xff]
        %v250 = vld [vmem:[#allocation5 + $0xe0] sm:$0xff]
        %v251 = vld [vmem:[#allocation5 + $0xe8] sm:$0xff]
        %v252 = vld [vmem:[#allocation5 + $0xf0] sm:$0xff]
        %v253 = vld [vmem:[#allocation5 + $0xf8] sm:$0xff]
        %v254 = vld [vmem:[#allocation5 + $0x100] sm:$0xff]
        %v255 = vld [vmem:[#allocation5 + $0x108] sm:$0xff]
        %v256 = vld [vmem:[#allocation5 + $0x110] sm:$0xff]
        %v257 = vld [vmem:[#allocation5 + $0x118] sm:$0xff]
        %v258 = vld [vmem:[#allocation5 + $0x120] sm:$0xff]
        %v259 = vld [vmem:[#allocation5 + $0x128] sm:$0xff]
        %v260 = vld [vmem:[#allocation5 + $0x130] sm:$0xff]
        %v261 = vld [vmem:[#allocation5 + $0x138] sm:$0xff]
        %v262 = vld [vmem:[#allocation5 + $0x140] sm:$0xff]
        %v263 = vld [vmem:[#allocation5 + $0x148] sm:$0xff]
        %v264 = vld [vmem:[#allocation5 + $0x150] sm:$0xff]
        %v265 = vld [vmem:[#allocation5 + $0x158] sm:$0xff]
        %v266 = vld [vmem:[#allocation5 + $0x160] sm:$0xff]
        %v267 = vld [vmem:[#allocation5 + $0x168] sm:$0xff]
        %v268 = vld [vmem:[#allocation5 + $0x170] sm:$0xff]
        %v269 = vld [vmem:[#allocation5 + $0x178] sm:$0xff]
        %v270 = vld [vmem:[#allocation5 + $0x180] sm:$0xff]
        %v271 = vld [vmem:[#allocation5 + $0x188] sm:$0xff]
        %v272 = vld [vmem:[#allocation5 + $0x190] sm:$0xff]
        %v273 = vld [vmem:[#allocation5 + $0x198] sm:$0xff]
        %v274 = vld [vmem:[#allocation5 + $0x1a0] sm:$0xff]
        %v275 = vld [vmem:[#allocation5 + $0x1a8] sm:$0xff]
        %v276 = vld [vmem:[#allocation5 + $0x1b0] sm:$0xff]
        %v277 = vld [vmem:[#allocation5 + $0x1b8] sm:$0xff]
        %v278 = vld [vmem:[#allocation5 + $0x1c0] sm:$0xff]
        %v279 = vld [vmem:[#allocation5 + $0x1c8] sm:$0xff]
        %v280 = vld [vmem:[#allocation5 + $0x1d0] sm:$0xff]
        %v281 = vld [vmem:[#allocation5 + $0x1d8] sm:$0xff]
        %v282 = vld [vmem:[#allocation5 + $0x1e0] sm:$0xff]
        %v283 = vld [vmem:[#allocation5 + $0x1e8] sm:$0xff]
        %v284 = vld [vmem:[#allocation5 + $0x1f0] sm:$0xff]
        %v285 = vld [vmem:[#allocation5 + $0x1f8] sm:$0xff]
        %v286 = vld [vmem:[#allocation5 + $0x200] sm:$0xff]
        %v287 = vld [vmem:[#allocation5 + $0x208] sm:$0xff]
        %v288 = vld [vmem:[#allocation5 + $0x210] sm:$0xff]
        %v289 = vld [vmem:[#allocation5 + $0x218] sm:$0xff]
        %v290 = vld [vmem:[#allocation5 + $0x220] sm:$0xff]
        %v291 = vld [vmem:[#allocation5 + $0x228] sm:$0xff]
        %v292 = vld [vmem:[#allocation5 + $0x230] sm:$0xff]
        %v293 = vld [vmem:[#allocation5 + $0x238] sm:$0xff]
        %v294 = vld [vmem:[#allocation5 + $0x240] sm:$0xff]
        %v295 = vld [vmem:[#allocation5 + $0x248] sm:$0xff]
        %v296 = vld [vmem:[#allocation5 + $0x250] sm:$0xff]
        %v297 = vld [vmem:[#allocation5 + $0x258] sm:$0xff]
        %v298 = vld [vmem:[#allocation5 + $0x260] sm:$0xff]
        %v299 = vld [vmem:[#allocation5 + $0x268] sm:$0xff]
        %v300 = vld [vmem:[#allocation5 + $0x270] sm:$0xff]
        %v301 = vld [vmem:[#allocation5 + $0x278] sm:$0xff]
        %v302 = vld [vmem:[#allocation5 + $0x280] sm:$0xff]
        %v303 = vld [vmem:[#allocation5 + $0x288] sm:$0xff]
        %v304 = vld [vmem:[#allocation5 + $0x290] sm:$0xff]
        %v305 = vld [vmem:[#allocation5 + $0x298] sm:$0xff]
        %v306 = vld [vmem:[#allocation5 + $0x2a0] sm:$0xff]
        %v307 = vld [vmem:[#allocation5 + $0x2a8] sm:$0xff]
        %v308 = vld [vmem:[#allocation5 + $0x2b0] sm:$0xff]
        %v309 = vld [vmem:[#allocation5 + $0x2b8] sm:$0xff]
        %v310 = vld [vmem:[#allocation5 + $0x2c0] sm:$0xff]
        %v311 = vld [vmem:[#allocation5 + $0x2c8] sm:$0xff]
        %v312 = vld [vmem:[#allocation5 + $0x2d0] sm:$0xff]
        %v313 = vld [vmem:[#allocation5 + $0x2d8] sm:$0xff]
        %v314 = vld [vmem:[#allocation5 + $0x2e0] sm:$0xff]
        %v315 = vld [vmem:[#allocation5 + $0x2e8] sm:$0xff]
        %v316 = vld [vmem:[#allocation5 + $0x2f0] sm:$0xff]
        %v317 = vld [vmem:[#allocation5 + $0x2f8] sm:$0xff]
        %v318 = vld [vmem:[#allocation5 + $0x300] sm:$0xff]
        %v319 = vld [vmem:[#allocation5 + $0x308] sm:$0xff]
        %v320 = vld [vmem:[#allocation5 + $0x310] sm:$0xff]
        %v321 = vld [vmem:[#allocation5 + $0x318] sm:$0xff]
        %v322 = vld [vmem:[#allocation5 + $0x320] sm:$0xff]
        %v323 = vld [vmem:[#allocation5 + $0x328] sm:$0xff]
        %v324 = vld [vmem:[#allocation5 + $0x330] sm:$0xff]
        %v325 = vld [vmem:[#allocation5 + $0x338] sm:$0xff]
        %v326 = vld [vmem:[#allocation5 + $0x340] sm:$0xff]
        %v327 = vld [vmem:[#allocation5 + $0x348] sm:$0xff]
        %v328 = vld [vmem:[#allocation5 + $0x350] sm:$0xff]
        %v329 = vld [vmem:[#allocation5 + $0x358] sm:$0xff]
        %v330 = vld [vmem:[#allocation5 + $0x360] sm:$0xff]
        %v331 = vld [vmem:[#allocation5 + $0x368] sm:$0xff]
        %v332 = vld [vmem:[#allocation5 + $0x370] sm:$0xff]
        %v333 = vld [vmem:[#allocation5 + $0x378] sm:$0xff]
        %v334 = vld [vmem:[#allocation5 + $0x380] sm:$0xff]
        %v335 = vld [vmem:[#allocation5 + $0x388] sm:$0xff]
        %v336 = vld [vmem:[#allocation5 + $0x390] sm:$0xff]
        %v337 = vld [vmem:[#allocation5 + $0x398] sm:$0xff]
        %v338 = vld [vmem:[#allocation5 + $0x3a0] sm:$0xff]
        %v339 = vld [vmem:[#allocation5 + $0x3a8] sm:$0xff]
        %v340 = vld [vmem:[#allocation5 + $0x3b0] sm:$0xff]
        %v341 = vld [vmem:[#allocation5 + $0x3b8] sm:$0xff]
        %v342 = vld [vmem:[#allocation5 + $0x3c0] sm:$0xff]
        %v343 = vld [vmem:[#allocation5 + $0x3c8] sm:$0xff]
        %v344 = vld [vmem:[#allocation5 + $0x3d0] sm:$0xff]
        %v345 = vld [vmem:[#allocation5 + $0x3d8] sm:$0xff]
        %v346 = vld [vmem:[#allocation5 + $0x3e0] sm:$0xff]
        %v347 = vld [vmem:[#allocation5 + $0x3e8] sm:$0xff]
        %v348 = vld [vmem:[#allocation5 + $0x3f0] sm:$0xff]
        %v349 = vld [vmem:[#allocation5 + $0x3f8] sm:$0xff]
        %v350 = vld [vmem:[#allocation5 + $0x400] sm:$0xff]
        %v351 = vld [vmem:[#allocation5 + $0x408] sm:$0xff]
        %v352 = vld [vmem:[#allocation5 + $0x410] sm:$0xff]
        %v353 = vld [vmem:[#allocation5 + $0x418] sm:$0xff]
        %v354 = vld [vmem:[#allocation5 + $0x420] sm:$0xff]
        %v355 = vld [vmem:[#allocation5 + $0x428] sm:$0xff]
        %v356 = vld [vmem:[#allocation5 + $0x430] sm:$0xff]
        %v357 = vld [vmem:[#allocation5 + $0x438] sm:$0xff]
        %v358 = vld [vmem:[#allocation5 + $0x440] sm:$0xff]
        %v359 = vld [vmem:[#allocation5 + $0x448] sm:$0xff]
        %v360 = vld [vmem:[#allocation5 + $0x450] sm:$0xff]
        %v361 = vld [vmem:[#allocation5 + $0x458] sm:$0xff]
        %v362 = vld [vmem:[#allocation5 + $0x460] sm:$0xff]
        %v363 = vld [vmem:[#allocation5 + $0x468] sm:$0xff]
        %v364 = vld [vmem:[#allocation5 + $0x470] sm:$0xff]
        %v365 = vld [vmem:[#allocation5 + $0x478] sm:$0xff]
        %v366 = vld [vmem:[#allocation5 + $0x480] sm:$0xff]
        %v367 = vld [vmem:[#allocation5 + $0x488] sm:$0xff]
        %v368 = vld [vmem:[#allocation5 + $0x490] sm:$0xff]
        %v369 = vld [vmem:[#allocation5 + $0x498] sm:$0xff]
        %v370 = vld [vmem:[#allocation5 + $0x4a0] sm:$0xff]
        %v371 = vld [vmem:[#allocation5 + $0x4a8] sm:$0xff]
        %v372 = vld [vmem:[#allocation5 + $0x4b0] sm:$0xff]
        %v373 = vld [vmem:[#allocation5 + $0x4b8] sm:$0xff]
        %v374 = vld [vmem:[#allocation5 + $0x4c0] sm:$0xff]
        %v375 = vld [vmem:[#allocation5 + $0x4c8] sm:$0xff]
        %v376 = vld [vmem:[#allocation5 + $0x4d0] sm:$0xff]
        %v377 = vld [vmem:[#allocation5 + $0x4d8] sm:$0xff]
        %v378 = vld [vmem:[#allocation5 + $0x4e0] sm:$0xff]
        %v379 = vld [vmem:[#allocation5 + $0x4e8] sm:$0xff]
        %v380 = vld [vmem:[#allocation5 + $0x4f0] sm:$0xff]
        %v381 = vld [vmem:[#allocation5 + $0x4f8] sm:$0xff]
        %v382 = vld [vmem:[#allocation5 + $0x500] sm:$0xff]
        %v383 = vld [vmem:[#allocation5 + $0x508] sm:$0xff]
        %v384 = vld [vmem:[#allocation5 + $0x510] sm:$0xff]
        %v385 = vld [vmem:[#allocation5 + $0x518] sm:$0xff]
        %v386 = vld [vmem:[#allocation5 + $0x520] sm:$0xff]
        %v387 = vld [vmem:[#allocation5 + $0x528] sm:$0xff]
        %v388 = vld [vmem:[#allocation5 + $0x530] sm:$0xff]
        %v389 = vld [vmem:[#allocation5 + $0x538] sm:$0xff]
        %v390 = vld [vmem:[#allocation5 + $0x540] sm:$0xff]
        %v391 = vld [vmem:[#allocation5 + $0x548] sm:$0xff]
        %v392 = vld [vmem:[#allocation5 + $0x550] sm:$0xff]
        %v393 = vld [vmem:[#allocation5 + $0x558] sm:$0xff]
        %v394 = vld [vmem:[#allocation5 + $0x560] sm:$0xff]
        %v395 = vld [vmem:[#allocation5 + $0x568] sm:$0xff]
        %v396 = vld [vmem:[#allocation5 + $0x570] sm:$0xff]
        %v397 = vld [vmem:[#allocation5 + $0x578] sm:$0xff]
        %v398 = vld [vmem:[#allocation5 + $0x580] sm:$0xff]
        %v399 = vld [vmem:[#allocation5 + $0x588] sm:$0xff]
        %v400 = vld [vmem:[#allocation5 + $0x590] sm:$0xff]
        %v401 = vld [vmem:[#allocation5 + $0x598] sm:$0xff]
        %v402 = vld [vmem:[#allocation5 + $0x5a0] sm:$0xff]
        %v403 = vld [vmem:[#allocation5 + $0x5a8] sm:$0xff]
        %v404 = vld [vmem:[#allocation5 + $0x5b0] sm:$0xff]
        %v405 = vld [vmem:[#allocation5 + $0x5b8] sm:$0xff]
        %v406 = vld [vmem:[#allocation5 + $0x5c0] sm:$0xff]
        %v407 = vld [vmem:[#allocation5 + $0x5c8] sm:$0xff]
        %v408 = vld [vmem:[#allocation5 + $0x5d0] sm:$0xff]
        %v409 = vld [vmem:[#allocation5 + $0x5d8] sm:$0xff]
        %v410 = vld [vmem:[#allocation5 + $0x5e0] sm:$0xff]
        %v411 = vld [vmem:[#allocation5 + $0x5e8] sm:$0xff]
        %v412 = vld [vmem:[#allocation5 + $0x5f0] sm:$0xff]
        %v413 = vld [vmem:[#allocation5 + $0x5f8] sm:$0xff]
        %v414 = vld [vmem:[#allocation5 + $0x600] sm:$0xff]
        %v415 = vld [vmem:[#allocation5 + $0x608] sm:$0xff]
        %v416 = vld [vmem:[#allocation5 + $0x610] sm:$0xff]
        %v417 = vld [vmem:[#allocation5 + $0x618] sm:$0xff]
        %v418 = vld [vmem:[#allocation5 + $0x620] sm:$0xff]
        %v419 = vld [vmem:[#allocation5 + $0x628] sm:$0xff]
        %v420 = vld [vmem:[#allocation5 + $0x630] sm:$0xff]
        %v421 = vld [vmem:[#allocation5 + $0x638] sm:$0xff]
        %v422 = vld [vmem:[#allocation5 + $0x640] sm:$0xff]
        %v423 = vld [vmem:[#allocation5 + $0x648] sm:$0xff]
        %v424 = vld [vmem:[#allocation5 + $0x650] sm:$0xff]
        %v425 = vld [vmem:[#allocation5 + $0x658] sm:$0xff]
        %v426 = vld [vmem:[#allocation5 + $0x660] sm:$0xff]
        %v427 = vld [vmem:[#allocation5 + $0x668] sm:$0xff]
        %v428 = vld [vmem:[#allocation5 + $0x670] sm:$0xff]
        %v429 = vld [vmem:[#allocation5 + $0x678] sm:$0xff]
        %v430 = vld [vmem:[#allocation5 + $0x680] sm:$0xff]
        %v431 = vld [vmem:[#allocation5 + $0x688] sm:$0xff]
        %v432 = vld [vmem:[#allocation5 + $0x690] sm:$0xff]
        %v433 = vld [vmem:[#allocation5 + $0x698] sm:$0xff]
        %v434 = vld [vmem:[#allocation5 + $0x6a0] sm:$0xff]
        %v435 = vld [vmem:[#allocation5 + $0x6a8] sm:$0xff]
        %v436 = vld [vmem:[#allocation5 + $0x6b0] sm:$0xff]
        %v437 = vld [vmem:[#allocation5 + $0x6b8] sm:$0xff]
        %v438 = vld [vmem:[#allocation5 + $0x6c0] sm:$0xff]
        %v439 = vld [vmem:[#allocation5 + $0x6c8] sm:$0xff]
        %v440 = vld [vmem:[#allocation5 + $0x6d0] sm:$0xff]
        %v441 = vld [vmem:[#allocation5 + $0x6d8] sm:$0xff]
        %v442 = vld [vmem:[#allocation5 + $0x6e0] sm:$0xff]
        %v443 = vld [vmem:[#allocation5 + $0x6e8] sm:$0xff]
        %v444 = vld [vmem:[#allocation5 + $0x6f0] sm:$0xff]
        %v445 = vld [vmem:[#allocation5 + $0x6f8] sm:$0xff]
        %v446 = vld [vmem:[#allocation5 + $0x700] sm:$0xff]
        %v447 = vld [vmem:[#allocation5 + $0x708] sm:$0xff]
        %v448 = vld [vmem:[#allocation5 + $0x710] sm:$0xff]
        %v449 = vld [vmem:[#allocation5 + $0x718] sm:$0xff]
        %v450 = vld [vmem:[#allocation5 + $0x720] sm:$0xff]
        %v451 = vld [vmem:[#allocation5 + $0x728] sm:$0xff]
        %v452 = vld [vmem:[#allocation5 + $0x730] sm:$0xff]
        %v453 = vld [vmem:[#allocation5 + $0x738] sm:$0xff]
        %v454 = vld [vmem:[#allocation5 + $0x740] sm:$0xff]
        %v455 = vld [vmem:[#allocation5 + $0x748] sm:$0xff]
        %v456 = vld [vmem:[#allocation5 + $0x750] sm:$0xff]
        %v457 = vld [vmem:[#allocation5 + $0x758] sm:$0xff]
        %v458 = vld [vmem:[#allocation5 + $0x760] sm:$0xff]
        %v459 = vld [vmem:[#allocation5 + $0x768] sm:$0xff]
        %v460 = vld [vmem:[#allocation5 + $0x770] sm:$0xff]
        %v461 = vld [vmem:[#allocation5 + $0x778] sm:$0xff]
        %v462 = vld [vmem:[#allocation5 + $0x780] sm:$0xff]
        %v463 = vld [vmem:[#allocation5 + $0x788] sm:$0xff]
        %v464 = vld [vmem:[#allocation5 + $0x790] sm:$0xff]
        %v465 = vld [vmem:[#allocation5 + $0x798] sm:$0xff]
        %v466 = vld [vmem:[#allocation5 + $0x7a0] sm:$0xff]
        %v467 = vld [vmem:[#allocation5 + $0x7a8] sm:$0xff]
        %v468 = vld [vmem:[#allocation5 + $0x7b0] sm:$0xff]
        %v469 = vld [vmem:[#allocation5 + $0x7b8] sm:$0xff]
        %v470 = vld [vmem:[#allocation5 + $0x7c0] sm:$0xff]
        %v471 = vld [vmem:[#allocation5 + $0x7c8] sm:$0xff]
        %v472 = vld [vmem:[#allocation5 + $0x7d0] sm:$0xff]
        %v473 = vld [vmem:[#allocation5 + $0x7d8] sm:$0xff]
        %v474 = vld [vmem:[#allocation5 + $0x7e0] sm:$0xff]
        %v475 = vld [vmem:[#allocation5 + $0x7e8] sm:$0xff]
        %v476 = vld [vmem:[#allocation5 + $0x7f0] sm:$0xff]
        %v477 = vld [vmem:[#allocation5 + $0x7f8] sm:$0xff]
        %v478 = vld [vmem:[#allocation7] sm:$0xff]
        %v480 = vperm.slane %v478, 0
        %v481 = vperm.slane %v478, 1
        %v482 = vperm.slane %v478, 2
        %v483 = vperm.slane %v478, 3
        %v484 = vperm.slane %v478, 4
        %v485 = vperm.slane %v478, 5
        %v486 = vperm.slane %v478, 6
        %v487 = vperm.slane %v478, 7
        %496 = vmatpush.msra.mxu0 %v342
        %497 = vmatpush.msra.mxu0 %v334
        %498 = vmatpush.msra.mxu0 %v326
        %499 = vmatpush.msra.mxu0 %v318
        %500 = vmatpush.msra.mxu0 %v310
        %501 = vmatpush.msra.mxu0 %v302
        %502 = vmatpush.msra.mxu0 %v294
        %503 = vmatpush.msra.mxu0 %v286
        %504 = vmatpush.msra.mxu0 %v278
        %505 = vmatpush.msra.mxu0 %v270
        %506 = vmatpush.msra.mxu0 %v262
        %507 = vmatpush.msra.mxu0 %v254
        %508 = vmatpush.msra.mxu0 %v246
        %509 = vmatpush.msra.mxu0 %v238
        %510 = vmatpush.msra.mxu0 %v230
        %511 = vmatpush.msra.mxu0 %v222
        %512 = vmatmul.f32.gmra.mxu0 %v220
        %v513 = vpop.f32.mrf.mxu0
        %v514 = vadd.f32 %v480, %v513
        %515 = vdwg.mxu0
        %516 = vmatpush.msra.mxu0 %v470
        %517 = vmatpush.msra.mxu0 %v462
        %518 = vmatpush.msra.mxu0 %v454
        %519 = vmatpush.msra.mxu0 %v446
        %520 = vmatpush.msra.mxu0 %v438
        %521 = vmatpush.msra.mxu0 %v430
        %522 = vmatpush.msra.mxu0 %v422
        %523 = vmatpush.msra.mxu0 %v414
        %524 = vmatpush.msra.mxu0 %v406
        %525 = vmatpush.msra.mxu0 %v398
        %526 = vmatpush.msra.mxu0 %v390
        %527 = vmatpush.msra.mxu0 %v382
        %528 = vmatpush.msra.mxu0 %v374
        %529 = vmatpush.msra.mxu0 %v366
        %530 = vmatpush.msra.mxu0 %v358
        %531 = vmatpush.msra.mxu0 %v350
        %532 = vmatmul.f32.gmra.mxu0 %v221
        %v533 = vpop.f32.mrf.mxu0
        %v534 = vadd.f32 %v514, %v533
        %535 = vdwg.mxu0
        %536 = vmatpush.msra.mxu0 %v343
        %537 = vmatpush.msra.mxu0 %v335
        %538 = vmatpush.msra.mxu0 %v327
        %539 = vmatpush.msra.mxu0 %v319
        %540 = vmatpush.msra.mxu0 %v311
        %541 = vmatpush.msra.mxu0 %v303
        %542 = vmatpush.msra.mxu0 %v295
        %543 = vmatpush.msra.mxu0 %v287
        %544 = vmatpush.msra.mxu0 %v279
        %545 = vmatpush.msra.mxu0 %v271
        %546 = vmatpush.msra.mxu0 %v263
        %547 = vmatpush.msra.mxu0 %v255
        %548 = vmatpush.msra.mxu0 %v247
        %549 = vmatpush.msra.mxu0 %v239
        %550 = vmatpush.msra.mxu0 %v231
        %551 = vmatpush.msra.mxu0 %v223
        %552 = vmatmul.f32.gmra.mxu0 %v220
        %v553 = vpop.f32.mrf.mxu0
        %v554 = vadd.f32 %v481, %v553
        %555 = vdwg.mxu0
        %556 = vmatpush.msra.mxu0 %v471
        %557 = vmatpush.msra.mxu0 %v463
        %558 = vmatpush.msra.mxu0 %v455
        %559 = vmatpush.msra.mxu0 %v447
        %560 = vmatpush.msra.mxu0 %v439
        %561 = vmatpush.msra.mxu0 %v431
        %562 = vmatpush.msra.mxu0 %v423
        %563 = vmatpush.msra.mxu0 %v415
        %564 = vmatpush.msra.mxu0 %v407
        %565 = vmatpush.msra.mxu0 %v399
        %566 = vmatpush.msra.mxu0 %v391
        %567 = vmatpush.msra.mxu0 %v383
        %568 = vmatpush.msra.mxu0 %v375
        %569 = vmatpush.msra.mxu0 %v367
        %570 = vmatpush.msra.mxu0 %v359
        %571 = vmatpush.msra.mxu0 %v351
        %572 = vmatmul.f32.gmra.mxu0 %v221
        %v573 = vpop.f32.mrf.mxu0
        %v574 = vadd.f32 %v554, %v573
        %575 = vdwg.mxu0
        %576 = vmatpush.msra.mxu0 %v344
        %577 = vmatpush.msra.mxu0 %v336
        %578 = vmatpush.msra.mxu0 %v328
        %579 = vmatpush.msra.mxu0 %v320
        %580 = vmatpush.msra.mxu0 %v312
        %581 = vmatpush.msra.mxu0 %v304
        %582 = vmatpush.msra.mxu0 %v296
        %583 = vmatpush.msra.mxu0 %v288
        %584 = vmatpush.msra.mxu0 %v280
        %585 = vmatpush.msra.mxu0 %v272
        %586 = vmatpush.msra.mxu0 %v264
        %587 = vmatpush.msra.mxu0 %v256
        %588 = vmatpush.msra.mxu0 %v248
        %589 = vmatpush.msra.mxu0 %v240
        %590 = vmatpush.msra.mxu0 %v232
        %591 = vmatpush.msra.mxu0 %v224
        %592 = vmatmul.f32.gmra.mxu0 %v220
        %v593 = vpop.f32.mrf.mxu0
        %v594 = vadd.f32 %v482, %v593
        %595 = vdwg.mxu0
        %596 = vmatpush.msra.mxu0 %v472
        %597 = vmatpush.msra.mxu0 %v464
        %598 = vmatpush.msra.mxu0 %v456
        %599 = vmatpush.msra.mxu0 %v448
        %600 = vmatpush.msra.mxu0 %v440
        %601 = vmatpush.msra.mxu0 %v432
        %602 = vmatpush.msra.mxu0 %v424
        %603 = vmatpush.msra.mxu0 %v416
        %604 = vmatpush.msra.mxu0 %v408
        %605 = vmatpush.msra.mxu0 %v400
        %606 = vmatpush.msra.mxu0 %v392
        %607 = vmatpush.msra.mxu0 %v384
        %608 = vmatpush.msra.mxu0 %v376
        %609 = vmatpush.msra.mxu0 %v368
        %610 = vmatpush.msra.mxu0 %v360
        %611 = vmatpush.msra.mxu0 %v352
        %612 = vmatmul.f32.gmra.mxu0 %v221
        %v613 = vpop.f32.mrf.mxu0
        %v614 = vadd.f32 %v594, %v613
        %615 = vdwg.mxu0
        %616 = vmatpush.msra.mxu0 %v345
        %617 = vmatpush.msra.mxu0 %v337
        %618 = vmatpush.msra.mxu0 %v329
        %619 = vmatpush.msra.mxu0 %v321
        %620 = vmatpush.msra.mxu0 %v313
        %621 = vmatpush.msra.mxu0 %v305
        %622 = vmatpush.msra.mxu0 %v297
        %623 = vmatpush.msra.mxu0 %v289
        %624 = vmatpush.msra.mxu0 %v281
        %625 = vmatpush.msra.mxu0 %v273
        %626 = vmatpush.msra.mxu0 %v265
        %627 = vmatpush.msra.mxu0 %v257
        %628 = vmatpush.msra.mxu0 %v249
        %629 = vmatpush.msra.mxu0 %v241
        %630 = vmatpush.msra.mxu0 %v233
        %631 = vmatpush.msra.mxu0 %v225
        %632 = vmatmul.f32.gmra.mxu0 %v220
        %v633 = vpop.f32.mrf.mxu0
        %v634 = vadd.f32 %v483, %v633
        %635 = vdwg.mxu0
        %636 = vmatpush.msra.mxu0 %v473
        %637 = vmatpush.msra.mxu0 %v465
        %638 = vmatpush.msra.mxu0 %v457
        %639 = vmatpush.msra.mxu0 %v449
        %640 = vmatpush.msra.mxu0 %v441
        %641 = vmatpush.msra.mxu0 %v433
        %642 = vmatpush.msra.mxu0 %v425
        %643 = vmatpush.msra.mxu0 %v417
        %644 = vmatpush.msra.mxu0 %v409
        %645 = vmatpush.msra.mxu0 %v401
        %646 = vmatpush.msra.mxu0 %v393
        %647 = vmatpush.msra.mxu0 %v385
        %648 = vmatpush.msra.mxu0 %v377
        %649 = vmatpush.msra.mxu0 %v369
        %650 = vmatpush.msra.mxu0 %v361
        %651 = vmatpush.msra.mxu0 %v353
        %652 = vmatmul.f32.gmra.mxu0 %v221
        %v653 = vpop.f32.mrf.mxu0
        %v654 = vadd.f32 %v634, %v653
        %655 = vdwg.mxu0
        %656 = vmatpush.msra.mxu0 %v346
        %657 = vmatpush.msra.mxu0 %v338
        %658 = vmatpush.msra.mxu0 %v330
        %659 = vmatpush.msra.mxu0 %v322
        %660 = vmatpush.msra.mxu0 %v314
        %661 = vmatpush.msra.mxu0 %v306
        %662 = vmatpush.msra.mxu0 %v298
        %663 = vmatpush.msra.mxu0 %v290
        %664 = vmatpush.msra.mxu0 %v282
        %665 = vmatpush.msra.mxu0 %v274
        %666 = vmatpush.msra.mxu0 %v266
        %667 = vmatpush.msra.mxu0 %v258
        %668 = vmatpush.msra.mxu0 %v250
        %669 = vmatpush.msra.mxu0 %v242
        %670 = vmatpush.msra.mxu0 %v234
        %671 = vmatpush.msra.mxu0 %v226
        %672 = vmatmul.f32.gmra.mxu0 %v220
        %v673 = vpop.f32.mrf.mxu0
        %v674 = vadd.f32 %v484, %v673
        %675 = vdwg.mxu0
        %676 = vmatpush.msra.mxu0 %v474
        %677 = vmatpush.msra.mxu0 %v466
        %678 = vmatpush.msra.mxu0 %v458
        %679 = vmatpush.msra.mxu0 %v450
        %680 = vmatpush.msra.mxu0 %v442
        %681 = vmatpush.msra.mxu0 %v434
        %682 = vmatpush.msra.mxu0 %v426
        %683 = vmatpush.msra.mxu0 %v418
        %684 = vmatpush.msra.mxu0 %v410
        %685 = vmatpush.msra.mxu0 %v402
        %686 = vmatpush.msra.mxu0 %v394
        %687 = vmatpush.msra.mxu0 %v386
        %688 = vmatpush.msra.mxu0 %v378
        %689 = vmatpush.msra.mxu0 %v370
        %690 = vmatpush.msra.mxu0 %v362
        %691 = vmatpush.msra.mxu0 %v354
        %692 = vmatmul.f32.gmra.mxu0 %v221
        %v693 = vpop.f32.mrf.mxu0
        %v694 = vadd.f32 %v674, %v693
        %695 = vdwg.mxu0
        %696 = vmatpush.msra.mxu0 %v347
        %697 = vmatpush.msra.mxu0 %v339
        %698 = vmatpush.msra.mxu0 %v331
        %699 = vmatpush.msra.mxu0 %v323
        %700 = vmatpush.msra.mxu0 %v315
        %701 = vmatpush.msra.mxu0 %v307
        %702 = vmatpush.msra.mxu0 %v299
        %703 = vmatpush.msra.mxu0 %v291
        %704 = vmatpush.msra.mxu0 %v283
        %705 = vmatpush.msra.mxu0 %v275
        %706 = vmatpush.msra.mxu0 %v267
        %707 = vmatpush.msra.mxu0 %v259
        %708 = vmatpush.msra.mxu0 %v251
        %709 = vmatpush.msra.mxu0 %v243
        %710 = vmatpush.msra.mxu0 %v235
        %711 = vmatpush.msra.mxu0 %v227
        %712 = vmatmul.f32.gmra.mxu0 %v220
        %v713 = vpop.f32.mrf.mxu0
        %v714 = vadd.f32 %v485, %v713
        %715 = vdwg.mxu0
        %716 = vmatpush.msra.mxu0 %v475
        %717 = vmatpush.msra.mxu0 %v467
        %718 = vmatpush.msra.mxu0 %v459
        %719 = vmatpush.msra.mxu0 %v451
        %720 = vmatpush.msra.mxu0 %v443
        %721 = vmatpush.msra.mxu0 %v435
        %722 = vmatpush.msra.mxu0 %v427
        %723 = vmatpush.msra.mxu0 %v419
        %724 = vmatpush.msra.mxu0 %v411
        %725 = vmatpush.msra.mxu0 %v403
        %726 = vmatpush.msra.mxu0 %v395
        %727 = vmatpush.msra.mxu0 %v387
        %728 = vmatpush.msra.mxu0 %v379
        %729 = vmatpush.msra.mxu0 %v371
        %730 = vmatpush.msra.mxu0 %v363
        %731 = vmatpush.msra.mxu0 %v355
        %732 = vmatmul.f32.gmra.mxu0 %v221
        %v733 = vpop.f32.mrf.mxu0
        %v734 = vadd.f32 %v714, %v733
        %735 = vdwg.mxu0
        %736 = vmatpush.msra.mxu0 %v348
        %737 = vmatpush.msra.mxu0 %v340
        %738 = vmatpush.msra.mxu0 %v332
        %739 = vmatpush.msra.mxu0 %v324
        %740 = vmatpush.msra.mxu0 %v316
        %741 = vmatpush.msra.mxu0 %v308
        %742 = vmatpush.msra.mxu0 %v300
        %743 = vmatpush.msra.mxu0 %v292
        %744 = vmatpush.msra.mxu0 %v284
        %745 = vmatpush.msra.mxu0 %v276
        %746 = vmatpush.msra.mxu0 %v268
        %747 = vmatpush.msra.mxu0 %v260
        %748 = vmatpush.msra.mxu0 %v252
        %749 = vmatpush.msra.mxu0 %v244
        %750 = vmatpush.msra.mxu0 %v236
        %751 = vmatpush.msra.mxu0 %v228
        %752 = vmatmul.f32.gmra.mxu0 %v220
        %v753 = vpop.f32.mrf.mxu0
        %v754 = vadd.f32 %v486, %v753
        %755 = vdwg.mxu0
        %756 = vmatpush.msra.mxu0 %v476
        %757 = vmatpush.msra.mxu0 %v468
        %758 = vmatpush.msra.mxu0 %v460
        %759 = vmatpush.msra.mxu0 %v452
        %760 = vmatpush.msra.mxu0 %v444
        %761 = vmatpush.msra.mxu0 %v436
        %762 = vmatpush.msra.mxu0 %v428
        %763 = vmatpush.msra.mxu0 %v420
        %764 = vmatpush.msra.mxu0 %v412
        %765 = vmatpush.msra.mxu0 %v404
        %766 = vmatpush.msra.mxu0 %v396
        %767 = vmatpush.msra.mxu0 %v388
        %768 = vmatpush.msra.mxu0 %v380
        %769 = vmatpush.msra.mxu0 %v372
        %770 = vmatpush.msra.mxu0 %v364
        %771 = vmatpush.msra.mxu0 %v356
        %772 = vmatmul.f32.gmra.mxu0 %v221
        %v773 = vpop.f32.mrf.mxu0
        %v774 = vadd.f32 %v754, %v773
        %775 = vdwg.mxu0
        %776 = vmatpush.msra.mxu0 %v349
        %777 = vmatpush.msra.mxu0 %v341
        %778 = vmatpush.msra.mxu0 %v333
        %779 = vmatpush.msra.mxu0 %v325
        %780 = vmatpush.msra.mxu0 %v317
        %781 = vmatpush.msra.mxu0 %v309
        %782 = vmatpush.msra.mxu0 %v301
        %783 = vmatpush.msra.mxu0 %v293
        %784 = vmatpush.msra.mxu0 %v285
        %785 = vmatpush.msra.mxu0 %v277
        %786 = vmatpush.msra.mxu0 %v269
        %787 = vmatpush.msra.mxu0 %v261
        %788 = vmatpush.msra.mxu0 %v253
        %789 = vmatpush.msra.mxu0 %v245
        %790 = vmatpush.msra.mxu0 %v237
        %791 = vmatpush.msra.mxu0 %v229
        %792 = vmatmul.f32.gmra.mxu0 %v220
        %v793 = vpop.f32.mrf.mxu0
        %v794 = vadd.f32 %v487, %v793
        %795 = vdwg.mxu0
        %796 = vmatpush.msra.mxu0 %v477
        %797 = vmatpush.msra.mxu0 %v469
        %798 = vmatpush.msra.mxu0 %v461
        %799 = vmatpush.msra.mxu0 %v453
        %800 = vmatpush.msra.mxu0 %v445
        %801 = vmatpush.msra.mxu0 %v437
        %802 = vmatpush.msra.mxu0 %v429
        %803 = vmatpush.msra.mxu0 %v421
        %804 = vmatpush.msra.mxu0 %v413
        %805 = vmatpush.msra.mxu0 %v405
        %806 = vmatpush.msra.mxu0 %v397
        %807 = vmatpush.msra.mxu0 %v389
        %808 = vmatpush.msra.mxu0 %v381
        %809 = vmatpush.msra.mxu0 %v373
        %810 = vmatpush.msra.mxu0 %v365
        %811 = vmatpush.msra.mxu0 %v357
        %812 = vmatmul.f32.gmra.mxu0 %v221
        %v813 = vpop.f32.mrf.mxu0
        %v814 = vadd.f32 %v794, %v813
        %815 = vdwg.mxu0
        %816 = vst [vmem:[%s219] sm:$0xff] %v534
        %817 = vst [vmem:[%s219 + $0x8] sm:$0xff] %v574
        %818 = vst [vmem:[%s219 + $0x10] sm:$0xff] %v614
        %819 = vst [vmem:[%s219 + $0x18] sm:$0xff] %v654
        %820 = vst [vmem:[%s219 + $0x20] sm:$0xff] %v694
        %821 = vst [vmem:[%s219 + $0x28] sm:$0xff] %v734
        %822 = vst [vmem:[%s219 + $0x30] sm:$0xff] %v774
        %823 = vst [vmem:[%s219 + $0x38] sm:$0xff] %v814
        %s824 = sand.u32 %s97, 1
        %s825 = scalar_lea.sflag [#allocation4], %s824
        %s826 = sand.u32 %s97, 1
        %s827 = smul.addr %s826, 64
        %s828 = scalar_lea.vmem [#allocation8], %s827
        // Predicated region
        $region45: #{tpu_custom_call.1} parent=31 // pred_check
          %p829 = pneg %p107
        $region46: #{tpu_custom_call.1} parent=31 // pred_check_branch
          %831 = sbr.rel (%p829) target = $region48
        $region47: #{tpu_custom_call.1} parent=31 // pred_region
          %833 = vsyncadd %s825, 0
          %s834 = smul.addr %s21, 8
          %s835 = smul.addr %s834, 8
          %s836 = scalar_lea.hbm %s3, %s835
          %s838 = sshll.u32 %s828, 4
          %s839 = int_to_ptr.vmem [resolvable:$true] %s838
          %s840 = sshll.u32 %s836, 4
          %s841 = int_to_ptr.hbm [resolvable:$true] %s840
          %843 = dma.vmem_to_hbm [thread:$0]  %s839, 1024, %s841, %s825
        $region48: #{tpu_custom_call.1} parent=31 // pred_fallthru
          _
      $region32: #{tpu_custom_call.1} parent=5 // pred_fallthru
        _
      %p844 = scmp.le.s32.totalorder 2, %s16
      // Predicated region
      $region49: #{tpu_custom_call.1} parent=5 // pred_check
        %p845 = pneg %p844
      $region50: #{tpu_custom_call.1} parent=5 // pred_check_branch
        %847 = sbr.rel (%p845) target = $region52
      $region51: #{tpu_custom_call.1} parent=5 // pred_region
        %s848 = ssub.s32 %s16, 2
        // Predicated region
        $region53: #{tpu_custom_call.1} parent=51 // pred_check
          %p849 = pneg %p113
        $region54: #{tpu_custom_call.1} parent=51 // pred_check_branch
          %851 = sbr.rel (%p849) target = $region56
        $region55: #{tpu_custom_call.1} parent=51 // pred_region
          %s852 = sand.u32 %s98, 1
          %s853 = scalar_lea.sflag [#allocation4], %s852
          %s854 = sand.u32 %s98, 1
          %s855 = smul.addr %s854, 64
          %s856 = scalar_lea.vmem [#allocation8], %s855
          %858 = dma.done %s853, 1024
        $region56: #{tpu_custom_call.1} parent=51 // pred_fallthru
          _
      $region52: #{tpu_custom_call.1} parent=5 // pred_fallthru
        _
    $region6: #{tpu_custom_call.1} parent=1 // loop_footer
      %s20 = sadd.s32 1, %s16
    $region7: #{tpu_custom_call.1} parent=1 // loop_footer_branch
      %15 = sbr.rel target = $region3
    $region8: #{tpu_custom_call.1} parent=1 // loop_exit
      _
    %859 = vsyncpa [#allocation3], 1
    %s860 = scalar_lea.sflag [#allocation3], 1
    %861 = vsyncpa %s860, 1
    %862 = vsyncpa [#allocation6], 1
    %863 = vsyncpa [#allocation4], 1
    %s864 = scalar_lea.sflag [#allocation4], 1
    %865 = vsyncpa %s864, 1

</llo_original>
